<compile_context>
chip_gen: v6e
topology: v6e:2x2x1
jax: 0.10.0
libtpu: 0.0.40
codegen_flags: <defaults>
</compile_context>

<pallas_src>
import jax
import jax.numpy as jnp
from jax.experimental import pallas as pl
from jax.experimental.pallas import tpu as pltpu

NEG_SLOPE = 0.01      # torch.nn.LeakyReLU default negative_slope
LANE = 128            # TPU lane width -> lane-dense feature padding
TILE_N_MAX = 1024     # batch tile (rows); comfortably fits v7x's 64 MiB VMEM


def _round_up(n, m):
    return ((n + m - 1) // m) * m


def _leaky_relu(x):
    # max(x, a*x) == LeakyReLU(x) for 0 <= a < 1: one vmul + one vmax.
    return jnp.maximum(x, NEG_SLOPE * x)


def mlp_kernel(x_ref, w1_ref, b1_ref, w2_ref, b2_ref, w3_ref, b3_ref, o_ref):
    # Layer 1: Linear + LeakyReLU (Dropout(p=0.0) is identity).
    h = jnp.dot(x_ref[...], w1_ref[...], preferred_element_type=jnp.float32)
    h = _leaky_relu(h + b1_ref[...])
    # Layer 2: Linear + LeakyReLU.
    h = jnp.dot(h.astype(jnp.bfloat16), w2_ref[...],
                preferred_element_type=jnp.float32)
    h = _leaky_relu(h + b2_ref[...])
    # Output layer: Linear (no activation) -> lane-padded quantile predictions.
    out = jnp.dot(h.astype(jnp.bfloat16), w3_ref[...],
                  preferred_element_type=jnp.float32)
    o_ref[...] = (out + b3_ref[...]).astype(o_ref.dtype)


def pinball_forward(x, padded_params, n_quantiles):
    """Pallas implementation of PinballLoss.forward (predict_residuals=False).

    padded_params = [(w1,b1),(w2,b2),(w3,b3)] from pad_params_lane_dense:
    weights (in, out) in bf16 with out padded to 128 lanes, biases (1, out) f32.
    """
    (w1, b1), (w2, b2), (w3, b3) = padded_params
    n, d_in = x.shape
    d_h1, d_h2, d_out = w1.shape[1], w2.shape[1], w3.shape[1]

    # Batch tile: as large as comfortably fits VMEM; multiple of 16 sublanes.
    tile_n = _round_up(n, 16) if n <= TILE_N_MAX else TILE_N_MAX
    n_pad = _round_up(n, tile_n)
    if n_pad != n:
        x = jnp.pad(x, ((0, n_pad - n), (0, 0)))
    x = x.astype(jnp.bfloat16)            # bf16 MXU operands, f32 accumulation
    grid = (n_pad // tile_n,)

    nbytes = lambda a: a.size * a.dtype.itemsize
    flops = 2 * n_pad * (d_in * d_h1 + d_h1 * d_h2 + d_h2 * d_out)
    bytes_accessed = (nbytes(x) + n_pad * d_out * 4
                      + sum(nbytes(a) for a in (w1, b1, w2, b2, w3, b3)))

    resident = lambda a: pl.BlockSpec(a.shape, lambda i: (0, 0))

    out = pl.pallas_call(
        mlp_kernel,
        out_shape=jax.ShapeDtypeStruct((n_pad, d_out), jnp.float32),
        grid=grid,
        in_specs=[
            pl.BlockSpec((tile_n, d_in), lambda i: (i, 0)),   # x: batch-tiled
            resident(w1), resident(b1),                       # params stay
            resident(w2), resident(b2),                       # VMEM-resident
            resident(w3), resident(b3),                       # across the grid
        ],
        out_specs=pl.BlockSpec((tile_n, d_out), lambda i: (i, 0)),
        compiler_params=pltpu.CompilerParams(
            dimension_semantics=("parallel",),    # batch axis -> megacore split
            vmem_limit_bytes=32 * 1024 * 1024,    # safe on v7x (64 MiB VMEM)
        ),
        cost_estimate=pl.CostEstimate(
            flops=flops, transcendentals=0, bytes_accessed=bytes_accessed),
    )(x, w1, b1, w2, b2, w3, b3)

    return out[:n, :n_quantiles]


def init_linear_params(key, fan_in, fan_out):
    """PyTorch-style Linear init: U(-1/sqrt(fan_in), 1/sqrt(fan_in)).

    Weight returned with shape (fan_in, fan_out) (transposed vs. torch), bias
    as (1, fan_out) for lane-friendly broadcasting inside the kernel.
    """
    kw, kb = jax.random.split(key)
    bound = 1.0 / jnp.sqrt(jnp.array(fan_in, jnp.float32))
    w = jax.random.uniform(kw, (fan_in, fan_out), jnp.float32, -bound, bound)
    b = jax.random.uniform(kb, (1, fan_out), jnp.float32, -bound, bound)
    return w, b


def pad_params_lane_dense(params, lane=LANE):
    """Zero-pad hidden/output dims to `lane` lanes; cast weights to bf16.

    Padded rows/cols are exactly zero; since LeakyReLU(0) = 0 the padded hidden
    lanes stay zero, so the [:, :Q] slice of the padded output is identical to
    the unpadded computation.
    """
    padded = []
    prev_out = params[0][0].shape[0]      # input feature dim stays unpadded
    for w, b in params:
        fan_in, fan_out = w.shape
        new_in = prev_out
        new_out = _round_up(fan_out, lane)
        w_p = jnp.zeros((new_in, new_out), jnp.float32)
        w_p = w_p.at[:fan_in, :fan_out].set(w)
        b_p = jnp.zeros((1, new_out), jnp.float32).at[:, :fan_out].set(b)
        padded.append((w_p.astype(jnp.bfloat16), b_p))
        prev_out = new_out
    return padded


def reference_forward_f32(x, params):
    """Exact f32 reference of the PyTorch forward (unpadded params)."""
    (w1, b1), (w2, b2), (w3, b3) = params
    h = _leaky_relu(x @ w1 + b1)
    h = _leaky_relu(h @ w2 + b2)
    return h @ w3 + b3


def reference_forward_bf16(x, padded_params, n_quantiles):
    """Reference matching the kernel's bf16-operand / f32-accumulate math."""
    (w1, b1), (w2, b2), (w3, b3) = padded_params
    h = jnp.dot(x.astype(jnp.bfloat16), w1, preferred_element_type=jnp.float32) + b1
    h = _leaky_relu(h)
    h = jnp.dot(h.astype(jnp.bfloat16), w2, preferred_element_type=jnp.float32) + b2
    h = _leaky_relu(h)
    out = jnp.dot(h.astype(jnp.bfloat16), w3, preferred_element_type=jnp.float32) + b3
    return out[:, :n_quantiles]


if __name__ == "__main__":
    # Module config (synthetic, deterministic):
    #   layer_sizes = [32, 64, 64], n_quantile_levels = 8 -> MLP dims [32,64,64,8]
    #   bounds / quantile_levels are not used in forward().
    layer_sizes = [32, 64, 64]
    n_quantile_levels = 8

    key = jax.random.PRNGKey(0)
    k_x1, k_x2, k1, k2, k3 = jax.random.split(key, 5)

    dims = layer_sizes + [n_quantile_levels]          # [32, 64, 64, 8]
    params = [
        init_linear_params(k1, dims[0], dims[1]),
        init_linear_params(k2, dims[1], dims[2]),
        init_linear_params(k3, dims[2], dims[3]),
    ]
    padded_params = pad_params_lane_dense(params)

    # (1) small batch (single grid step), (2) larger batch exercising multiple
    # grid steps and batch padding (2560 -> 3072 rows, TILE_N = 1024).
    for batch, kx in ((8, k_x1), (2560, k_x2)):
        x = jax.random.normal(kx, (batch, layer_sizes[0]), jnp.float32)

        out = jax.block_until_ready(
            pinball_forward(x, padded_params, n_quantile_levels))
        assert out.shape == (batch, n_quantile_levels)

        # Tight check vs a reference using identical bf16-operand math.
        ref_bf16 = reference_forward_bf16(x, padded_params, n_quantile_levels)
        assert jnp.allclose(out, ref_bf16, atol=2e-3, rtol=2e-3), \
            "mismatch vs bf16-matched reference"

        # Loose sanity check vs the exact f32 forward (catches padding/slice bugs).
        ref_f32 = reference_forward_f32(x, params)
        assert jnp.allclose(out, ref_f32, atol=0.15, rtol=0.1), \
            "mismatch vs f32 reference"

    # TODO(synk): loss()/get_F_at_y()/get_logscore_at_y() (searchsorted-based
    # CDF evaluation) are not part of forward(); not implemented as kernels here.
    print("KERNEL_OK")
</pallas_src>

<mosaic_0001>
module attributes {stable_mosaic.version = 11 : i64} {
  func.func @mlp_kernel(%arg0: i32, %arg1: memref<16x32xbf16, #tpu.memory_space<vmem>>, %arg2: memref<32x128xbf16, #tpu.memory_space<vmem>>, %arg3: memref<1x128xf32, #tpu.memory_space<vmem>>, %arg4: memref<128x128xbf16, #tpu.memory_space<vmem>>, %arg5: memref<1x128xf32, #tpu.memory_space<vmem>>, %arg6: memref<128x128xbf16, #tpu.memory_space<vmem>>, %arg7: memref<1x128xf32, #tpu.memory_space<vmem>>, %arg8: memref<16x128xf32, #tpu.memory_space<vmem>>) attributes {dimension_semantics = [#tpu.dimension_semantics<parallel>], iteration_bounds = array<i64: 1>, scalar_prefetch = 0 : i64, scratch_operands = 0 : i64, tpu.core_type = #tpu.core_type<tc>, window_params = [{transform_indices = @transform_0, window_bounds = array<i64: 16, 32>}, {pipeline_mode = #tpu.pipeline_mode<synchronous>, transform_indices = @transform_1, window_bounds = array<i64: 32, 128>}, {pipeline_mode = #tpu.pipeline_mode<synchronous>, transform_indices = @transform_2, window_bounds = array<i64: 1, 128>}, {pipeline_mode = #tpu.pipeline_mode<synchronous>, transform_indices = @transform_3, window_bounds = array<i64: 128, 128>}, {pipeline_mode = #tpu.pipeline_mode<synchronous>, transform_indices = @transform_4, window_bounds = array<i64: 1, 128>}, {pipeline_mode = #tpu.pipeline_mode<synchronous>, transform_indices = @transform_5, window_bounds = array<i64: 128, 128>}, {pipeline_mode = #tpu.pipeline_mode<synchronous>, transform_indices = @transform_6, window_bounds = array<i64: 1, 128>}, {transform_indices = @transform_7, window_bounds = array<i64: 16, 128>}]} {
    %c0 = arith.constant 0 : index
    %c0_0 = arith.constant 0 : index
    %0 = vector.load %arg1[%c0, %c0_0] : memref<16x32xbf16, #tpu.memory_space<vmem>>, vector<16x32xbf16>
    %c0_1 = arith.constant 0 : index
    %c0_2 = arith.constant 0 : index
    %1 = vector.load %arg2[%c0_1, %c0_2] : memref<32x128xbf16, #tpu.memory_space<vmem>>, vector<32x128xbf16>
    %cst = arith.constant dense<0.000000e+00> : vector<16x128xf32>
    %2 = tpu.matmul %0, %1, %cst {dimension_numbers = #tpu.dot_dimension_numbers<[1], [0], [0], [1], [0, 0, 1, 1], [], []>} : vector<16x32xbf16>, vector<32x128xbf16>, vector<16x128xf32> -> vector<16x128xf32>
    %c0_3 = arith.constant 0 : index
    %c0_4 = arith.constant 0 : index
    %3 = vector.load %arg3[%c0_3, %c0_4] : memref<1x128xf32, #tpu.memory_space<vmem>>, vector<1x128xf32>
    %4 = vector.broadcast %3 : vector<1x128xf32> to vector<16x128xf32>
    %5 = arith.addf %2, %4 : vector<16x128xf32>
    %cst_5 = arith.constant 0.00999999977 : f32
    %6 = vector.broadcast %cst_5 : f32 to vector<16x128xf32>
    %7 = arith.mulf %6, %5 : vector<16x128xf32>
    %8 = arith.maximumf %5, %7 : vector<16x128xf32>
    %9 = arith.truncf %8 : vector<16x128xf32> to vector<16x128xbf16>
    %c0_6 = arith.constant 0 : index
    %c0_7 = arith.constant 0 : index
    %10 = vector.load %arg4[%c0_6, %c0_7] : memref<128x128xbf16, #tpu.memory_space<vmem>>, vector<128x128xbf16>
    %cst_8 = arith.constant dense<0.000000e+00> : vector<16x128xf32>
    %11 = tpu.matmul %9, %10, %cst_8 {dimension_numbers = #tpu.dot_dimension_numbers<[1], [0], [0], [1], [0, 0, 1, 1], [], []>} : vector<16x128xbf16>, vector<128x128xbf16>, vector<16x128xf32> -> vector<16x128xf32>
    %c0_9 = arith.constant 0 : index
    %c0_10 = arith.constant 0 : index
    %12 = vector.load %arg5[%c0_9, %c0_10] : memref<1x128xf32, #tpu.memory_space<vmem>>, vector<1x128xf32>
    %13 = vector.broadcast %12 : vector<1x128xf32> to vector<16x128xf32>
    %14 = arith.addf %11, %13 : vector<16x128xf32>
    %cst_11 = arith.constant 0.00999999977 : f32
    %15 = vector.broadcast %cst_11 : f32 to vector<16x128xf32>
    %16 = arith.mulf %15, %14 : vector<16x128xf32>
    %17 = arith.maximumf %14, %16 : vector<16x128xf32>
    %18 = arith.truncf %17 : vector<16x128xf32> to vector<16x128xbf16>
    %c0_12 = arith.constant 0 : index
    %c0_13 = arith.constant 0 : index
    %19 = vector.load %arg6[%c0_12, %c0_13] : memref<128x128xbf16, #tpu.memory_space<vmem>>, vector<128x128xbf16>
    %cst_14 = arith.constant dense<0.000000e+00> : vector<16x128xf32>
    %20 = tpu.matmul %18, %19, %cst_14 {dimension_numbers = #tpu.dot_dimension_numbers<[1], [0], [0], [1], [0, 0, 1, 1], [], []>} : vector<16x128xbf16>, vector<128x128xbf16>, vector<16x128xf32> -> vector<16x128xf32>
    %c0_15 = arith.constant 0 : index
    %c0_16 = arith.constant 0 : index
    %21 = vector.load %arg7[%c0_15, %c0_16] : memref<1x128xf32, #tpu.memory_space<vmem>>, vector<1x128xf32>
    %22 = vector.broadcast %21 : vector<1x128xf32> to vector<16x128xf32>
    %23 = arith.addf %20, %22 : vector<16x128xf32>
    %c0_17 = arith.constant 0 : index
    %c0_18 = arith.constant 0 : index
    %24 = vector.load %arg8[%c0_17, %c0_18] : memref<16x128xf32, #tpu.memory_space<vmem>>, vector<16x128xf32>
    tpu.vector_store %arg8[%c0_17, %c0_18], %23 {strides = array<i32>} : memref<16x128xf32, #tpu.memory_space<vmem>>, vector<16x128xf32>,
    return
  }
  func.func @transform_0(%arg0: i32) -> (i32, i32) {
    %c0_i32 = arith.constant 0 : i32
    %c0_i32_0 = arith.constant 0 : i32
    return %arg0, %c0_i32 : i32, i32
  }
  func.func @transform_1(%arg0: i32) -> (i32, i32) {
    %c0_i32 = arith.constant 0 : i32
    %c0_i32_0 = arith.constant 0 : i32
    %c0_i32_1 = arith.constant 0 : i32
    return %c0_i32, %c0_i32_0 : i32, i32
  }
  func.func @transform_2(%arg0: i32) -> (i32, i32) {
    %c0_i32 = arith.constant 0 : i32
    %c0_i32_0 = arith.constant 0 : i32
    %c0_i32_1 = arith.constant 0 : i32
    return %c0_i32, %c0_i32_0 : i32, i32
  }
  func.func @transform_3(%arg0: i32) -> (i32, i32) {
    %c0_i32 = arith.constant 0 : i32
    %c0_i32_0 = arith.constant 0 : i32
    %c0_i32_1 = arith.constant 0 : i32
    return %c0_i32, %c0_i32_0 : i32, i32
  }
  func.func @transform_4(%arg0: i32) -> (i32, i32) {
    %c0_i32 = arith.constant 0 : i32
    %c0_i32_0 = arith.constant 0 : i32
    %c0_i32_1 = arith.constant 0 : i32
    return %c0_i32, %c0_i32_0 : i32, i32
  }
  func.func @transform_5(%arg0: i32) -> (i32, i32) {
    %c0_i32 = arith.constant 0 : i32
    %c0_i32_0 = arith.constant 0 : i32
    %c0_i32_1 = arith.constant 0 : i32
    return %c0_i32, %c0_i32_0 : i32, i32
  }
  func.func @transform_6(%arg0: i32) -> (i32, i32) {
    %c0_i32 = arith.constant 0 : i32
    %c0_i32_0 = arith.constant 0 : i32
    %c0_i32_1 = arith.constant 0 : i32
    return %c0_i32, %c0_i32_0 : i32, i32
  }
  func.func @transform_7(%arg0: i32) -> (i32, i32) {
    %c0_i32 = arith.constant 0 : i32
    %c0_i32_0 = arith.constant 0 : i32
    return %arg0, %c0_i32 : i32, i32
  }
}

</mosaic_0001>

<llo_original>
// kernel: tpu_custom_call.1
$region0: #{tpu_custom_call.1}
  #allocation0 [shape = 'u32[]', space=smem, size = 0x4, offset = 0x4, fixed_abs, tag = 'smem constant byte address 0x4 - core index']
  #allocation1 [shape = 'u32[144,128]{1,0:T(1,128)}', space=vmem, size = 0x12000, scoped, tag = 'internal scratch']
  %s0 = inlined_call_operand.hbm [shape: bf16[16,32], index: 0, kind: input, shape index: {}]
  %s1 = inlined_call_operand.hbm [shape: bf16[32,128], index: 1, kind: input, shape index: {}]
  %s2 = inlined_call_operand.vmem [shape: f32[1,128], index: 2, kind: input, shape index: {}]
  %s3 = inlined_call_operand.hbm [shape: bf16[128,128], index: 3, kind: input, shape index: {}]
  %s4 = inlined_call_operand.vmem [shape: f32[1,128], index: 4, kind: input, shape index: {}]
  %s5 = inlined_call_operand.hbm [shape: bf16[128,128], index: 5, kind: input, shape index: {}]
  %s6 = inlined_call_operand.vmem [shape: f32[1,128], index: 6, kind: input, shape index: {}]
  %s7 = inlined_call_operand.hbm [shape: f32[16,128], index: 7, kind: output, shape index: {}]
  %s8 = sld [smem:[#allocation0]]
  $region54: #{tpu_custom_call.1} parent=0
    _
  %s10 = ssub.s32 1, %s8
  %s11 = scalar_select 0, %s10, %s8
  $region1: #{tpu_custom_call.1} parent=0
    #allocation2 [shape = 'u8[4096]{0}', space=vmem, size = 0x1000, scoped, tag = 'input window, operand 0, single buffered']
    #allocation3 [shape = 's32[1]{0}', space=sflag, size = 0x4, scoped, tag = 'scoped memory for tpu_custom_call.1']
    #allocation4 [shape = 's32[1]{0}', space=sflag, size = 0x4, scoped, tag = 'scoped memory for tpu_custom_call.1']
    #allocation5 [shape = 'u8[8192]{0}', space=vmem, size = 0x2000, scoped, tag = 'input window, operand 1, single buffered']
    #allocation6 [shape = 's32[1]{0}', space=sflag, size = 0x4, scoped, tag = 'scoped memory for tpu_custom_call.1']
    #allocation7 [shape = 'u8[32768]{0}', space=vmem, size = 0x8000, scoped, tag = 'input window, operand 3, single buffered']
    #allocation8 [shape = 'u8[32768]{0}', space=vmem, size = 0x8000, scoped, tag = 'input window, operand 5, single buffered']
    #allocation9 [shape = 's32[1]{0}', space=sflag, size = 0x4, scoped, tag = 'scoped memory for tpu_custom_call.1']
    #allocation10 [shape = 'u8[8192]{0}', space=vmem, size = 0x2000, scoped, tag = 'output window, operand 0, single buffered']
    %12 = vsyncpa [#allocation3], 0
    %13 = vsyncpa [#allocation6], 0
    %14 = vsyncpa [#allocation9], 0
    %15 = vsyncpa [#allocation4], 0
    // Predicated region
    $region2: #{tpu_custom_call.1} parent=1 // pred_check
      _
    $region3: #{tpu_custom_call.1} parent=1 // pred_check_branch
      %17 = sbr.rel (0) target = $region5
    $region4: #{tpu_custom_call.1} parent=1 // pred_region
      %s19 = ssub.s32 128, 128
      %20 = vsyncadd [#allocation3], %s19
      %s21 = sshll.u32 [#allocation2], 4
      %s22 = int_to_ptr.vmem [resolvable:$true] %s21
      %27 = dma.hbm_to_vmem [thread:$0]  %s0, 128, %s22, [#allocation3], 64, 64, 4
    $region5: #{tpu_custom_call.1} parent=1 // pred_fallthru
      _
    // Predicated region
    $region6: #{tpu_custom_call.1} parent=1 // pred_check
      _
    $region7: #{tpu_custom_call.1} parent=1 // pred_check_branch
      %29 = sbr.rel (0) target = $region9
    $region8: #{tpu_custom_call.1} parent=1 // pred_region
      %s31 = ssub.s32 256, 256
      %32 = vsyncadd [#allocation6], %s31
      %s33 = sshll.u32 [#allocation5], 4
      %s34 = int_to_ptr.vmem [resolvable:$true] %s33
      %39 = dma.hbm_to_vmem [thread:$0]  %s1, 256, %s34, [#allocation6], 64, 64, 4
    $region9: #{tpu_custom_call.1} parent=1 // pred_fallthru
      _
    // Predicated region
    $region10: #{tpu_custom_call.1} parent=1 // pred_check
      _
    $region11: #{tpu_custom_call.1} parent=1 // pred_check_branch
      %41 = sbr.rel (0) target = $region13
    $region12: #{tpu_custom_call.1} parent=1 // pred_region
      _
    $region13: #{tpu_custom_call.1} parent=1 // pred_fallthru
      _
    // Predicated region
    $region14: #{tpu_custom_call.1} parent=1 // pred_check
      _
    $region15: #{tpu_custom_call.1} parent=1 // pred_check_branch
      %43 = sbr.rel (0) target = $region17
    $region16: #{tpu_custom_call.1} parent=1 // pred_region
      %s45 = ssub.s32 1024, 1024
      %46 = vsyncadd [#allocation6], %s45
      %s47 = sshll.u32 [#allocation7], 4
      %s48 = int_to_ptr.vmem [resolvable:$true] %s47
      %53 = dma.hbm_to_vmem [thread:$0]  %s3, 1024, %s48, [#allocation6], 64, 64, 4
    $region17: #{tpu_custom_call.1} parent=1 // pred_fallthru
      _
    // Predicated region
    $region18: #{tpu_custom_call.1} parent=1 // pred_check
      _
    $region19: #{tpu_custom_call.1} parent=1 // pred_check_branch
      %55 = sbr.rel (0) target = $region21
    $region20: #{tpu_custom_call.1} parent=1 // pred_region
      _
    $region21: #{tpu_custom_call.1} parent=1 // pred_fallthru
      _
    // Predicated region
    $region22: #{tpu_custom_call.1} parent=1 // pred_check
      _
    $region23: #{tpu_custom_call.1} parent=1 // pred_check_branch
      %57 = sbr.rel (0) target = $region25
    $region24: #{tpu_custom_call.1} parent=1 // pred_region
      %s59 = ssub.s32 1024, 1024
      %60 = vsyncadd [#allocation9], %s59
      %s61 = sshll.u32 [#allocation8], 4
      %s62 = int_to_ptr.vmem [resolvable:$true] %s61
      %67 = dma.hbm_to_vmem [thread:$0]  %s5, 1024, %s62, [#allocation9], 64, 64, 4
    $region25: #{tpu_custom_call.1} parent=1 // pred_fallthru
      _
    // Predicated region
    $region26: #{tpu_custom_call.1} parent=1 // pred_check
      _
    $region27: #{tpu_custom_call.1} parent=1 // pred_check_branch
      %69 = sbr.rel (0) target = $region29
    $region28: #{tpu_custom_call.1} parent=1 // pred_region
      _
    $region29: #{tpu_custom_call.1} parent=1 // pred_fallthru
      _
    // Predicated region
    $region30: #{tpu_custom_call.1} parent=1 // pred_check
      _
    $region31: #{tpu_custom_call.1} parent=1 // pred_check_branch
      %71 = sbr.rel (0) target = $region33
    $region32: #{tpu_custom_call.1} parent=1 // pred_region
      %72 = dma.done [#allocation3], 128
    $region33: #{tpu_custom_call.1} parent=1 // pred_fallthru
      _
    // Predicated region
    $region34: #{tpu_custom_call.1} parent=1 // pred_check
      _
    $region35: #{tpu_custom_call.1} parent=1 // pred_check_branch
      %74 = sbr.rel (0) target = $region37
    $region36: #{tpu_custom_call.1} parent=1 // pred_region
      %75 = dma.done [#allocation6], 256
    $region37: #{tpu_custom_call.1} parent=1 // pred_fallthru
      _
    // Predicated region
    $region38: #{tpu_custom_call.1} parent=1 // pred_check
      _
    $region39: #{tpu_custom_call.1} parent=1 // pred_check_branch
      %77 = sbr.rel (0) target = $region41
    $region40: #{tpu_custom_call.1} parent=1 // pred_region
      %78 = dma.done [#allocation6], 1024
    $region41: #{tpu_custom_call.1} parent=1 // pred_fallthru
      _
    // Predicated region
    $region42: #{tpu_custom_call.1} parent=1 // pred_check
      _
    $region43: #{tpu_custom_call.1} parent=1 // pred_check_branch
      %80 = sbr.rel (0) target = $region45
    $region44: #{tpu_custom_call.1} parent=1 // pred_region
      %81 = dma.done [#allocation9], 1024
    $region45: #{tpu_custom_call.1} parent=1 // pred_fallthru
      _
    %v83 = vld [vmem:[#allocation2] sm:$0xf]
    %v84 = vld [vmem:[#allocation2 + $0x4] sm:$0xf]
    %v85 = vld [vmem:[#allocation5] sm:$0xf]
    %v86 = vld [vmem:[#allocation5 + $0x4] sm:$0xf]
    %v87 = vld [vmem:[#allocation5 + $0x8] sm:$0xf]
    %v88 = vld [vmem:[#allocation5 + $0xc] sm:$0xf]
    %v89 = vld [vmem:[%s2] sm:$0x1]
    %v91 = vlaneseq
    %v92 = vshrl.u32 %v91, 7
    %v93 = vsub.s32 0, %v92
    %v94 = vrot.slane %v89, %v93
    %v98 = vunpack.c.l.b16 %v83
    %v99 = vunpack.c.l.b16 %v84
    %v100 = vpack.c.b16 %v99, %v98
    %v105 = vunpack.c.l.b16 %v85
    %v106 = vunpack.c.l.b16 %v86
    %v107 = vunpack.c.l.b16 %v87
    %v108 = vunpack.c.l.b16 %v88
    %v109 = vpack.c.b16 %v106, %v105
    %v110 = vpack.c.b16 %v108, %v107
    %vm113 = vcmask 261120
    %v115 = vsel %vm113, %v100, 0
    %117 = vmatprep.subr.bf16.mxu0 0
    %118 = vmatpush1.bf16.msra.mxu0 0
    %119 = vmatprep.subr.bf16.mxu0 0
    %120 = vmatpush1.bf16.msra.mxu0 0
    %121 = vmatprep.subr.bf16.mxu0 0
    %122 = vmatpush1.bf16.msra.mxu0 0
    %123 = vmatprep.subr.bf16.mxu0 0
    %124 = vmatpush1.bf16.msra.mxu0 0
    %125 = vmatprep.subr.bf16.mxu0 0
    %126 = vmatpush1.bf16.msra.mxu0 0
    %127 = vmatprep.subr.bf16.mxu0 0
    %128 = vmatpush1.bf16.msra.mxu0 0
    %129 = vmatprep.subr.bf16.mxu0 0
    %130 = vmatpush1.bf16.msra.mxu0 %v110
    %131 = vmatprep.subr.bf16.mxu0 0
    %132 = vmatpush1.bf16.msra.mxu0 %v109
    %133 = vmatprep.subr.bf16.mxu0 0
    %134 = vmatpush2.bf16.msra.mxu0 0
    %135 = vmatprep.subr.bf16.mxu0 0
    %136 = vmatpush2.bf16.msra.mxu0 0
    %137 = vmatprep.subr.bf16.mxu0 0
    %138 = vmatpush2.bf16.msra.mxu0 0
    %139 = vmatprep.subr.bf16.mxu0 0
    %140 = vmatpush2.bf16.msra.mxu0 0
    %141 = vmatprep.subr.bf16.mxu0 0
    %142 = vmatpush2.bf16.msra.mxu0 0
    %143 = vmatprep.subr.bf16.mxu0 0
    %144 = vmatpush2.bf16.msra.mxu0 0
    %145 = vmatprep.subr.bf16.mxu0 0
    %146 = vmatpush2.bf16.msra.mxu0 0
    %147 = vmatprep.subr.bf16.mxu0 0
    %148 = vmatpush2.bf16.msra.mxu0 0
    %149 = vmatprep.mubr.bf16.mxu0 0
    %150 = vmatmul.mubr.bf16.gmra.mxu0 %v115
    %v151 = vpop.f32.mrf.mxu0
    %v152 = vadd.f32 %v94, %v151
    %v153 = vpop.f32.mrf.mxu0
    %v154 = vpop.f32.mrf.mxu0
    %v155 = vadd.f32 %v94, %v154
    %v156 = vpop.f32.mrf.mxu0
    %157 = vdwg.mxu0
    %v158 = vmul.f32 %v152, 0.01
    %v159 = vmul.f32 %v155, 0.01
    %v160 = vmax.f32 %v152, %v158
    %v161 = vmax.f32 %v155, %v159
    %v162 = vpack.c.bf16 %v161, %v160
    %v163 = vld [vmem:[#allocation7] sm:$0xf]
    %v164 = vld [vmem:[#allocation7 + $0x4] sm:$0xf]
    %v165 = vld [vmem:[#allocation7 + $0x8] sm:$0xf]
    %v166 = vld [vmem:[#allocation7 + $0xc] sm:$0xf]
    %v167 = vld [vmem:[#allocation7 + $0x10] sm:$0xf]
    %v168 = vld [vmem:[#allocation7 + $0x14] sm:$0xf]
    %v169 = vld [vmem:[#allocation7 + $0x18] sm:$0xf]
    %v170 = vld [vmem:[#allocation7 + $0x1c] sm:$0xf]
    %v171 = vld [vmem:[#allocation7 + $0x20] sm:$0xf]
    %v172 = vld [vmem:[#allocation7 + $0x24] sm:$0xf]
    %v173 = vld [vmem:[#allocation7 + $0x28] sm:$0xf]
    %v174 = vld [vmem:[#allocation7 + $0x2c] sm:$0xf]
    %v175 = vld [vmem:[#allocation7 + $0x30] sm:$0xf]
    %v176 = vld [vmem:[#allocation7 + $0x34] sm:$0xf]
    %v177 = vld [vmem:[#allocation7 + $0x38] sm:$0xf]
    %v178 = vld [vmem:[#allocation7 + $0x3c] sm:$0xf]
    %v179 = vld [vmem:[%s4] sm:$0x1]
    %v181 = vlaneseq
    %v182 = vshrl.u32 %v181, 7
    %v183 = vsub.s32 0, %v182
    %v184 = vrot.slane %v179, %v183
    %v202 = vunpack.c.l.b16 %v163
    %v203 = vunpack.c.l.b16 %v164
    %v204 = vunpack.c.l.b16 %v165
    %v205 = vunpack.c.l.b16 %v166
    %v206 = vunpack.c.l.b16 %v167
    %v207 = vunpack.c.l.b16 %v168
    %v208 = vunpack.c.l.b16 %v169
    %v209 = vunpack.c.l.b16 %v170
    %v210 = vunpack.c.l.b16 %v171
    %v211 = vunpack.c.l.b16 %v172
    %v212 = vunpack.c.l.b16 %v173
    %v213 = vunpack.c.l.b16 %v174
    %v214 = vunpack.c.l.b16 %v175
    %v215 = vunpack.c.l.b16 %v176
    %v216 = vunpack.c.l.b16 %v177
    %v217 = vunpack.c.l.b16 %v178
    %v218 = vpack.c.b16 %v203, %v202
    %v219 = vpack.c.b16 %v205, %v204
    %v220 = vpack.c.b16 %v207, %v206
    %v221 = vpack.c.b16 %v209, %v208
    %v222 = vpack.c.b16 %v211, %v210
    %v223 = vpack.c.b16 %v213, %v212
    %v224 = vpack.c.b16 %v215, %v214
    %v225 = vpack.c.b16 %v217, %v216
    %234 = vmatprep.subr.bf16.mxu0 0
    %235 = vmatpush1.bf16.msra.mxu0 %v225
    %236 = vmatprep.subr.bf16.mxu0 0
    %237 = vmatpush1.bf16.msra.mxu0 %v224
    %238 = vmatprep.subr.bf16.mxu0 0
    %239 = vmatpush1.bf16.msra.mxu0 %v223
    %240 = vmatprep.subr.bf16.mxu0 0
    %241 = vmatpush1.bf16.msra.mxu0 %v222
    %242 = vmatprep.subr.bf16.mxu0 0
    %243 = vmatpush1.bf16.msra.mxu0 %v221
    %244 = vmatprep.subr.bf16.mxu0 0
    %245 = vmatpush1.bf16.msra.mxu0 %v220
    %246 = vmatprep.subr.bf16.mxu0 0
    %247 = vmatpush1.bf16.msra.mxu0 %v219
    %248 = vmatprep.subr.bf16.mxu0 0
    %249 = vmatpush1.bf16.msra.mxu0 %v218
    %250 = vmatprep.subr.bf16.mxu0 0
    %251 = vmatpush2.bf16.msra.mxu0 0
    %252 = vmatprep.subr.bf16.mxu0 0
    %253 = vmatpush2.bf16.msra.mxu0 0
    %254 = vmatprep.subr.bf16.mxu0 0
    %255 = vmatpush2.bf16.msra.mxu0 0
    %256 = vmatprep.subr.bf16.mxu0 0
    %257 = vmatpush2.bf16.msra.mxu0 0
    %258 = vmatprep.subr.bf16.mxu0 0
    %259 = vmatpush2.bf16.msra.mxu0 0
    %260 = vmatprep.subr.bf16.mxu0 0
    %261 = vmatpush2.bf16.msra.mxu0 0
    %262 = vmatprep.subr.bf16.mxu0 0
    %263 = vmatpush2.bf16.msra.mxu0 0
    %264 = vmatprep.subr.bf16.mxu0 0
    %265 = vmatpush2.bf16.msra.mxu0 0
    %266 = vmatprep.mubr.bf16.mxu0 0
    %267 = vmatmul.mubr.bf16.gmra.mxu0 %v162
    %v268 = vpop.f32.mrf.mxu0
    %v269 = vadd.f32 %v184, %v268
    %v270 = vpop.f32.mrf.mxu0
    %v271 = vpop.f32.mrf.mxu0
    %v272 = vadd.f32 %v184, %v271
    %v273 = vpop.f32.mrf.mxu0
    %274 = vdwg.mxu0
    %v275 = vmul.f32 %v269, 0.01
    %v276 = vmul.f32 %v272, 0.01
    %v277 = vmax.f32 %v269, %v275
    %v278 = vmax.f32 %v272, %v276
    %v279 = vpack.c.bf16 %v278, %v277
    %v280 = vld [vmem:[#allocation8] sm:$0xf]
    %v281 = vld [vmem:[#allocation8 + $0x4] sm:$0xf]
    %v282 = vld [vmem:[#allocation8 + $0x8] sm:$0xf]
    %v283 = vld [vmem:[#allocation8 + $0xc] sm:$0xf]
    %v284 = vld [vmem:[#allocation8 + $0x10] sm:$0xf]
    %v285 = vld [vmem:[#allocation8 + $0x14] sm:$0xf]
    %v286 = vld [vmem:[#allocation8 + $0x18] sm:$0xf]
    %v287 = vld [vmem:[#allocation8 + $0x1c] sm:$0xf]
    %v288 = vld [vmem:[#allocation8 + $0x20] sm:$0xf]
    %v289 = vld [vmem:[#allocation8 + $0x24] sm:$0xf]
    %v290 = vld [vmem:[#allocation8 + $0x28] sm:$0xf]
    %v291 = vld [vmem:[#allocation8 + $0x2c] sm:$0xf]
    %v292 = vld [vmem:[#allocation8 + $0x30] sm:$0xf]
    %v293 = vld [vmem:[#allocation8 + $0x34] sm:$0xf]
    %v294 = vld [vmem:[#allocation8 + $0x38] sm:$0xf]
    %v295 = vld [vmem:[#allocation8 + $0x3c] sm:$0xf]
    %v296 = vld [vmem:[%s6] sm:$0x1]
    %v298 = vlaneseq
    %v299 = vshrl.u32 %v298, 7
    %v300 = vsub.s32 0, %v299
    %v301 = vrot.slane %v296, %v300
    %v319 = vunpack.c.l.b16 %v280
    %v320 = vunpack.c.l.b16 %v281
    %v321 = vunpack.c.l.b16 %v282
    %v322 = vunpack.c.l.b16 %v283
    %v323 = vunpack.c.l.b16 %v284
    %v324 = vunpack.c.l.b16 %v285
    %v325 = vunpack.c.l.b16 %v286
    %v326 = vunpack.c.l.b16 %v287
    %v327 = vunpack.c.l.b16 %v288
    %v328 = vunpack.c.l.b16 %v289
    %v329 = vunpack.c.l.b16 %v290
    %v330 = vunpack.c.l.b16 %v291
    %v331 = vunpack.c.l.b16 %v292
    %v332 = vunpack.c.l.b16 %v293
    %v333 = vunpack.c.l.b16 %v294
    %v334 = vunpack.c.l.b16 %v295
    %v335 = vpack.c.b16 %v320, %v319
    %v336 = vpack.c.b16 %v322, %v321
    %v337 = vpack.c.b16 %v324, %v323
    %v338 = vpack.c.b16 %v326, %v325
    %v339 = vpack.c.b16 %v328, %v327
    %v340 = vpack.c.b16 %v330, %v329
    %v341 = vpack.c.b16 %v332, %v331
    %v342 = vpack.c.b16 %v334, %v333
    %351 = vmatprep.subr.bf16.mxu0 0
    %352 = vmatpush1.bf16.msra.mxu0 %v342
    %353 = vmatprep.subr.bf16.mxu0 0
    %354 = vmatpush1.bf16.msra.mxu0 %v341
    %355 = vmatprep.subr.bf16.mxu0 0
    %356 = vmatpush1.bf16.msra.mxu0 %v340
    %357 = vmatprep.subr.bf16.mxu0 0
    %358 = vmatpush1.bf16.msra.mxu0 %v339
    %359 = vmatprep.subr.bf16.mxu0 0
    %360 = vmatpush1.bf16.msra.mxu0 %v338
    %361 = vmatprep.subr.bf16.mxu0 0
    %362 = vmatpush1.bf16.msra.mxu0 %v337
    %363 = vmatprep.subr.bf16.mxu0 0
    %364 = vmatpush1.bf16.msra.mxu0 %v336
    %365 = vmatprep.subr.bf16.mxu0 0
    %366 = vmatpush1.bf16.msra.mxu0 %v335
    %367 = vmatprep.subr.bf16.mxu0 0
    %368 = vmatpush2.bf16.msra.mxu0 0
    %369 = vmatprep.subr.bf16.mxu0 0
    %370 = vmatpush2.bf16.msra.mxu0 0
    %371 = vmatprep.subr.bf16.mxu0 0
    %372 = vmatpush2.bf16.msra.mxu0 0
    %373 = vmatprep.subr.bf16.mxu0 0
    %374 = vmatpush2.bf16.msra.mxu0 0
    %375 = vmatprep.subr.bf16.mxu0 0
    %376 = vmatpush2.bf16.msra.mxu0 0
    %377 = vmatprep.subr.bf16.mxu0 0
    %378 = vmatpush2.bf16.msra.mxu0 0
    %379 = vmatprep.subr.bf16.mxu0 0
    %380 = vmatpush2.bf16.msra.mxu0 0
    %381 = vmatprep.subr.bf16.mxu0 0
    %382 = vmatpush2.bf16.msra.mxu0 0
    %383 = vmatprep.mubr.bf16.mxu0 0
    %384 = vmatmul.mubr.bf16.gmra.mxu0 %v279
    %v385 = vpop.f32.mrf.mxu0
    %v386 = vadd.f32 %v301, %v385
    %v387 = vpop.f32.mrf.mxu0
    %v388 = vpop.f32.mrf.mxu0
    %v389 = vadd.f32 %v301, %v388
    %v390 = vpop.f32.mrf.mxu0
    %391 = vdwg.mxu0
    %392 = vst [vmem:[#allocation10] sm:$0xff] %v386
    %393 = vst [vmem:[#allocation10 + $0x8] sm:$0xff] %v389
    // Predicated region
    $region46: #{tpu_custom_call.1} parent=1 // pred_check
      _
    $region47: #{tpu_custom_call.1} parent=1 // pred_check_branch
      %395 = sbr.rel (0) target = $region49
    $region48: #{tpu_custom_call.1} parent=1 // pred_region
      %s397 = ssub.s32 256, 256
      %398 = vsyncadd [#allocation4], %s397
      %s399 = sshll.u32 [#allocation10], 4
      %s400 = int_to_ptr.vmem [resolvable:$true] %s399
      %405 = dma.vmem_to_hbm [thread:$0]  %s400, 256, %s7, [#allocation4], 128, 128, 8
    $region49: #{tpu_custom_call.1} parent=1 // pred_fallthru
      _
    // Predicated region
    $region50: #{tpu_custom_call.1} parent=1 // pred_check
      _
    $region51: #{tpu_custom_call.1} parent=1 // pred_check_branch
      %407 = sbr.rel (0) target = $region53
    $region52: #{tpu_custom_call.1} parent=1 // pred_region
      %408 = dma.done [#allocation4], 256
    $region53: #{tpu_custom_call.1} parent=1 // pred_fallthru
      _
    %409 = vsyncpa [#allocation3], 1
    %410 = vsyncpa [#allocation6], 1
    %411 = vsyncpa [#allocation9], 1
    %412 = vsyncpa [#allocation4], 1

</llo_original>
